<compile_context>
chip_gen: v5e
topology: v5e:2x2
jax: 0.10.0
libtpu: 0.0.40
codegen_flags: <defaults>
</compile_context>

<pallas_src>
import functools

import jax
import jax.numpy as jnp
from jax.experimental import pallas as pl
from jax.experimental.pallas import tpu as pltpu


def mhea_kernel(x_ref, xyz_ref, wqx_ref, wqz_ref, bq_ref,
                wkbd_ref, bk_ref, gamma_ref, beta_ref,
                wvbd_ref, bv_ref, wo_ref, bo_ref, out_ref, *, eps):
    x = x_ref[0]          # [C, N]  bf16, channels-first (N on lanes)
    xyzT = xyz_ref[0]     # [3, N]  f32

    # ---- Q projection: q^T = Wq_x^T @ x (+ xyz part as 3 VPU FMAs) + bq ------
    q = jnp.dot(wqx_ref[...], x, preferred_element_type=jnp.float32)    # [C, N]
    wqz = wqz_ref[...]                                                  # [C, 3]
    q = q + wqz[:, 0:1] * xyzT[0:1, :]
    q = q + wqz[:, 1:2] * xyzT[1:2, :]
    q = q + wqz[:, 2:3] * xyzT[2:3, :]
    q = q + bq_ref[...]

    # ---- K projection for all heads at once (block-diagonal weights) ---------
    k = jnp.dot(wkbd_ref[...], q.astype(wkbd_ref.dtype),
                preferred_element_type=jnp.float32) + bk_ref[...]       # [HM, N]

    # ---- softmax over the point axis N (lane axis) ----------------------------
    k = k - jnp.max(k, axis=-1, keepdims=True)
    e = jnp.exp(k)
    att = e * pl.reciprocal(jnp.sum(e, axis=-1, keepdims=True), approx=True)

    # ---- LayerNorm over the whole [heads, N, M] slab of this batch element ----
    cnt = jnp.float32(att.shape[0] * att.shape[1])
    mean = jnp.sum(att) / cnt
    var = jnp.sum(att * att) / cnt - mean * mean
    inv = jax.lax.rsqrt(var + eps)
    ln = (att - mean) * (inv * gamma_ref[...]) + beta_ref[...]          # [HM, N]

    # ---- V projection (all heads, block-diag) then O projection ---------------
    v = jnp.dot(wvbd_ref[...], ln.astype(wvbd_ref.dtype),
                preferred_element_type=jnp.float32) + bv_ref[...]       # [C, N]
    out = jnp.dot(wo_ref[...], v.astype(wo_ref.dtype),
                  preferred_element_type=jnp.float32) + bo_ref[...]     # [C, N]
    out_ref[0] = out.astype(out_ref.dtype)


def multi_head_external_attention(x, xyz, params, heads, *,
                                  matmul_dtype=jnp.bfloat16, eps=1e-5):
    """x: [B, C, N], xyz: [B, N, 3] -> [B, C, N]  (same contract as the module)."""
    B, C, N = x.shape
    ch = C // heads
    M = params["wk"].shape[1]
    HM = heads * M
    f32 = jnp.float32

    # Channels-first operands — no [B,C,N] <-> [B,N,C] transposes required.
    x_cn = x.astype(matmul_dtype)                              # [B, C, N]
    xyz_t = jnp.transpose(xyz, (0, 2, 1)).astype(f32)          # [B, 3, N] (tiny)

    # Transposed / head-fused weights (built once; constants under jit).
    eye = jnp.eye(heads, dtype=f32)
    wq_xT = params["wq_x"].T.astype(matmul_dtype)              # [C, C]
    wq_zT = params["wq_xyz"].T.astype(f32)                     # [C, 3]
    bq_c = params["bq"].reshape(C, 1).astype(f32)
    wkbdT = jnp.kron(eye, params["wk"].T.astype(f32)).astype(matmul_dtype)   # [HM, C]
    bk_c = jnp.tile(params["bk"].reshape(M), heads).reshape(HM, 1).astype(f32)
    wvbdT = jnp.kron(eye, params["wv"].T.astype(f32)).astype(matmul_dtype)   # [C, HM]
    bv_c = jnp.tile(params["bv"].reshape(ch), heads).reshape(C, 1).astype(f32)
    gammaT = jnp.transpose(params["gamma"], (0, 2, 1)).reshape(HM, N).astype(f32)
    betaT = jnp.transpose(params["beta"], (0, 2, 1)).reshape(HM, N).astype(f32)
    woT = params["wo"].T.astype(matmul_dtype)                  # [C, C]
    bo_c = params["bo"].reshape(C, 1).astype(f32)

    # Explicit VMEM budget (double-buffered per-batch blocks + invariant
    # weights + f32 intermediates), clamped for v5e/v6e/v7x portability.
    mm = 2 if matmul_dtype == jnp.bfloat16 else 4
    per_step = (
        2 * C * N * mm                                   # x block (x2 buffers)
        + 2 * C * N * 4                                  # out block (x2 buffers)
        + 2 * 3 * N * 4                                  # xyz block
        + 2 * ((2 * C * C + HM * C + C * HM) * mm        # fused weights
               + (3 * C + HM + 3 * C + 2 * HM * N) * 4)  # biases, gamma, beta
        + 10 * max(C, HM) * N * 4                        # f32 intermediates
    )
    vmem_limit = int(min(48 * 1024 * 1024, max(16 * 1024 * 1024, 2 * per_step)))

    kernel = functools.partial(mhea_kernel, eps=eps)
    out = pl.pallas_call(
        kernel,
        out_shape=jax.ShapeDtypeStruct((B, C, N), jnp.float32),
        grid=(B,),
        in_specs=[
            pl.BlockSpec((1, C, N), lambda b: (b, 0, 0)),   # x (channels-first)
            pl.BlockSpec((1, 3, N), lambda b: (b, 0, 0)),   # xyz^T
            pl.BlockSpec((C, C), lambda b: (0, 0)),         # Wq_x^T
            pl.BlockSpec((C, 3), lambda b: (0, 0)),         # Wq_xyz^T
            pl.BlockSpec((C, 1), lambda b: (0, 0)),         # bq
            pl.BlockSpec((HM, C), lambda b: (0, 0)),        # Wk block-diag^T
            pl.BlockSpec((HM, 1), lambda b: (0, 0)),        # bk (tiled per head)
            pl.BlockSpec((HM, N), lambda b: (0, 0)),        # LN gamma
            pl.BlockSpec((HM, N), lambda b: (0, 0)),        # LN beta
            pl.BlockSpec((C, HM), lambda b: (0, 0)),        # Wv block-diag^T
            pl.BlockSpec((C, 1), lambda b: (0, 0)),         # bv (tiled per head)
            pl.BlockSpec((C, C), lambda b: (0, 0)),         # Wo^T
            pl.BlockSpec((C, 1), lambda b: (0, 0)),         # bo
        ],
        out_specs=pl.BlockSpec((1, C, N), lambda b: (b, 0, 0)),
        compiler_params=pltpu.CompilerParams(
            dimension_semantics=("parallel",),   # grid over B; keep B even on v7x
            vmem_limit_bytes=vmem_limit,
        ),
    )(x_cn, xyz_t, wq_xT, wq_zT, bq_c, wkbdT, bk_c,
      gammaT, betaT, wvbdT, bv_c, woT, bo_c)
    return out                                              # already [B, C, N]


def reference(x, xyz, params, heads):
    """Pure-JAX f32 replica of the PyTorch forward (for verification)."""
    B, C, N = x.shape
    ch = C // heads
    xt = jnp.transpose(x, (0, 2, 1))
    xc = jnp.concatenate([xt, xyz], axis=2)
    wq = jnp.concatenate([params["wq_x"], params["wq_xyz"]], axis=0)
    q = xc @ wq + params["bq"][0]
    q = q.reshape(B, N, heads, ch).transpose(0, 2, 1, 3)           # [B, h, N, ch]
    k = q @ params["wk"] + params["bk"][0]                         # [B, h, N, M]
    sm = jax.nn.softmax(k, axis=2)                                 # softmax over N
    mean = sm.mean(axis=(1, 2, 3), keepdims=True)
    var = ((sm - mean) ** 2).mean(axis=(1, 2, 3), keepdims=True)
    ln = (sm - mean) / jnp.sqrt(var + 1e-5) * params["gamma"] + params["beta"]
    v = ln @ params["wv"] + params["bv"][0]                        # [B, h, N, ch]
    v = v.transpose(0, 2, 1, 3).reshape(B, N, C)
    out = v @ params["wo"] + params["bo"][0]
    return jnp.transpose(out, (0, 2, 1))


def init_params(key, channels, external_memory, point_num, heads):
    ch = channels // heads
    ks = jax.random.split(key, 10)
    s = 0.1
    return {
        "wq_x":   s * jax.random.normal(ks[0], (channels, channels), jnp.float32),
        "wq_xyz": s * jax.random.normal(ks[1], (3, channels), jnp.float32),
        "bq":     s * jax.random.normal(ks[2], (1, channels), jnp.float32),
        "wk":     s * jax.random.normal(ks[3], (ch, external_memory), jnp.float32),
        "bk":     s * jax.random.normal(ks[4], (1, external_memory), jnp.float32),
        "gamma":  1.0 + s * jax.random.normal(
            ks[5], (heads, point_num, external_memory), jnp.float32),
        "beta":   s * jax.random.normal(
            ks[6], (heads, point_num, external_memory), jnp.float32),
        "wv":     s * jax.random.normal(ks[7], (external_memory, ch), jnp.float32),
        "bv":     s * jax.random.normal(ks[8], (1, ch), jnp.float32),
        "wo":     s * jax.random.normal(ks[9], (channels, channels), jnp.float32),
        "bo":     s * jax.random.normal(ks[0], (1, channels), jnp.float32),
    }


if __name__ == "__main__":
    B, C, N = 2, 32, 16            # B even so both v7x TensorCores get work
    heads, external_memory, point_num = 4, 8, N

    key = jax.random.PRNGKey(0)
    kx, kz, kp = jax.random.split(key, 3)
    x = jax.random.normal(kx, (B, C, N), jnp.float32)      # [B, C, N] like PyTorch input
    xyz = jax.random.normal(kz, (B, N, 3), jnp.float32)    # [B, N, 3]
    params = init_params(kp, C, external_memory, point_num, heads)

    out = multi_head_external_attention(x, xyz, params, heads)
    out = jax.block_until_ready(out)

    ref = reference(x, xyz, params, heads)
    assert out.shape == (B, C, N), out.shape
    # Tolerance covers bf16 MXU inputs + approximate softmax reciprocal; a real
    # layout/fusion bug would produce O(0.1+) errors, far above this threshold.
    assert jnp.allclose(out, ref, rtol=3e-2, atol=3e-2), float(jnp.max(jnp.abs(out - ref)))
    print("KERNEL_OK")
</pallas_src>

<mosaic_0001>
module attributes {stable_mosaic.version = 11 : i64} {
  func.func @mhea_kernel(%arg0: i32, %arg1: memref<1x32x16xbf16, #tpu.memory_space<vmem>>, %arg2: memref<1x3x16xf32, #tpu.memory_space<vmem>>, %arg3: memref<32x32xbf16, #tpu.memory_space<vmem>>, %arg4: memref<32x3xf32, #tpu.memory_space<vmem>>, %arg5: memref<32x1xf32, #tpu.memory_space<vmem>>, %arg6: memref<32x32xbf16, #tpu.memory_space<vmem>>, %arg7: memref<32x1xf32, #tpu.memory_space<vmem>>, %arg8: memref<32x16xf32, #tpu.memory_space<vmem>>, %arg9: memref<32x16xf32, #tpu.memory_space<vmem>>, %arg10: memref<32x32xbf16, #tpu.memory_space<vmem>>, %arg11: memref<32x1xf32, #tpu.memory_space<vmem>>, %arg12: memref<32x32xbf16, #tpu.memory_space<vmem>>, %arg13: memref<32x1xf32, #tpu.memory_space<vmem>>, %arg14: memref<1x32x16xf32, #tpu.memory_space<vmem>>) attributes {dimension_semantics = [#tpu.dimension_semantics<parallel>], iteration_bounds = array<i64: 2>, scalar_prefetch = 0 : i64, scratch_operands = 0 : i64, tpu.core_type = #tpu.core_type<tc>, window_params = [{transform_indices = @transform_0, window_bounds = array<i64: 1, 32, 16>}, {transform_indices = @transform_1, window_bounds = array<i64: 1, 3, 16>}, {pipeline_mode = #tpu.pipeline_mode<synchronous>, transform_indices = @transform_2, window_bounds = array<i64: 32, 32>}, {pipeline_mode = #tpu.pipeline_mode<synchronous>, transform_indices = @transform_3, window_bounds = array<i64: 32, 3>}, {pipeline_mode = #tpu.pipeline_mode<synchronous>, transform_indices = @transform_4, window_bounds = array<i64: 32, 1>}, {pipeline_mode = #tpu.pipeline_mode<synchronous>, transform_indices = @transform_5, window_bounds = array<i64: 32, 32>}, {pipeline_mode = #tpu.pipeline_mode<synchronous>, transform_indices = @transform_6, window_bounds = array<i64: 32, 1>}, {pipeline_mode = #tpu.pipeline_mode<synchronous>, transform_indices = @transform_7, window_bounds = array<i64: 32, 16>}, {pipeline_mode = #tpu.pipeline_mode<synchronous>, transform_indices = @transform_8, window_bounds = array<i64: 32, 16>}, {pipeline_mode = #tpu.pipeline_mode<synchronous>, transform_indices = @transform_9, window_bounds = array<i64: 32, 32>}, {pipeline_mode = #tpu.pipeline_mode<synchronous>, transform_indices = @transform_10, window_bounds = array<i64: 32, 1>}, {pipeline_mode = #tpu.pipeline_mode<synchronous>, transform_indices = @transform_11, window_bounds = array<i64: 32, 32>}, {pipeline_mode = #tpu.pipeline_mode<synchronous>, transform_indices = @transform_12, window_bounds = array<i64: 32, 1>}, {transform_indices = @transform_13, window_bounds = array<i64: 1, 32, 16>}]} {
    %c0 = arith.constant 0 : index
    %c0_0 = arith.constant 0 : index
    %c0_1 = arith.constant 0 : index
    %0 = vector.load %arg1[%c0, %c0_0, %c0_1] : memref<1x32x16xbf16, #tpu.memory_space<vmem>>, vector<1x32x16xbf16>
    %1 = vector.shape_cast %0 : vector<1x32x16xbf16> to vector<32x16xbf16>
    %c0_2 = arith.constant 0 : index
    %c0_3 = arith.constant 0 : index
    %c0_4 = arith.constant 0 : index
    %2 = vector.load %arg2[%c0_2, %c0_3, %c0_4] : memref<1x3x16xf32, #tpu.memory_space<vmem>>, vector<1x3x16xf32>
    %3 = vector.shape_cast %2 : vector<1x3x16xf32> to vector<3x16xf32>
    %c0_5 = arith.constant 0 : index
    %c0_6 = arith.constant 0 : index
    %4 = vector.load %arg3[%c0_5, %c0_6] : memref<32x32xbf16, #tpu.memory_space<vmem>>, vector<32x32xbf16>
    %cst = arith.constant dense<0.000000e+00> : vector<32x16xf32>
    %5 = tpu.matmul %4, %1, %cst {dimension_numbers = #tpu.dot_dimension_numbers<[1], [0], [0], [1], [0, 0, 1, 1], [], []>} : vector<32x32xbf16>, vector<32x16xbf16>, vector<32x16xf32> -> vector<32x16xf32>
    %c0_7 = arith.constant 0 : index
    %c0_8 = arith.constant 0 : index
    %6 = vector.load %arg4[%c0_7, %c0_8] : memref<32x3xf32, #tpu.memory_space<vmem>>, vector<32x3xf32>
    %7 = vector.extract_strided_slice %6 {offsets = [0, 0], sizes = [32, 1], strides = [1, 1]} : vector<32x3xf32> to vector<32x1xf32>
    %8 = vector.extract_strided_slice %3 {offsets = [0, 0], sizes = [1, 16], strides = [1, 1]} : vector<3x16xf32> to vector<1x16xf32>
    %9 = vector.broadcast %7 : vector<32x1xf32> to vector<32x16xf32>
    %10 = vector.broadcast %8 : vector<1x16xf32> to vector<32x16xf32>
    %11 = arith.mulf %9, %10 : vector<32x16xf32>
    %12 = arith.addf %5, %11 : vector<32x16xf32>
    %13 = vector.extract_strided_slice %6 {offsets = [0, 1], sizes = [32, 1], strides = [1, 1]} : vector<32x3xf32> to vector<32x1xf32>
    %14 = vector.extract_strided_slice %3 {offsets = [1, 0], sizes = [1, 16], strides = [1, 1]} : vector<3x16xf32> to vector<1x16xf32>
    %15 = vector.broadcast %13 : vector<32x1xf32> to vector<32x16xf32>
    %16 = vector.broadcast %14 : vector<1x16xf32> to vector<32x16xf32>
    %17 = arith.mulf %15, %16 : vector<32x16xf32>
    %18 = arith.addf %12, %17 : vector<32x16xf32>
    %19 = vector.extract_strided_slice %6 {offsets = [0, 2], sizes = [32, 1], strides = [1, 1]} : vector<32x3xf32> to vector<32x1xf32>
    %20 = vector.extract_strided_slice %3 {offsets = [2, 0], sizes = [1, 16], strides = [1, 1]} : vector<3x16xf32> to vector<1x16xf32>
    %21 = vector.broadcast %19 : vector<32x1xf32> to vector<32x16xf32>
    %22 = vector.broadcast %20 : vector<1x16xf32> to vector<32x16xf32>
    %23 = arith.mulf %21, %22 : vector<32x16xf32>
    %24 = arith.addf %18, %23 : vector<32x16xf32>
    %c0_9 = arith.constant 0 : index
    %c0_10 = arith.constant 0 : index
    %25 = vector.load %arg5[%c0_9, %c0_10] : memref<32x1xf32, #tpu.memory_space<vmem>>, vector<32x1xf32>
    %26 = vector.broadcast %25 : vector<32x1xf32> to vector<32x16xf32>
    %27 = arith.addf %24, %26 : vector<32x16xf32>
    %c0_11 = arith.constant 0 : index
    %c0_12 = arith.constant 0 : index
    %28 = vector.load %arg6[%c0_11, %c0_12] : memref<32x32xbf16, #tpu.memory_space<vmem>>, vector<32x32xbf16>
    %29 = arith.truncf %27 : vector<32x16xf32> to vector<32x16xbf16>
    %cst_13 = arith.constant dense<0.000000e+00> : vector<32x16xf32>
    %30 = tpu.matmul %28, %29, %cst_13 {dimension_numbers = #tpu.dot_dimension_numbers<[1], [0], [0], [1], [0, 0, 1, 1], [], []>} : vector<32x32xbf16>, vector<32x16xbf16>, vector<32x16xf32> -> vector<32x16xf32>
    %c0_14 = arith.constant 0 : index
    %c0_15 = arith.constant 0 : index
    %31 = vector.load %arg7[%c0_14, %c0_15] : memref<32x1xf32, #tpu.memory_space<vmem>>, vector<32x1xf32>
    %32 = vector.broadcast %31 : vector<32x1xf32> to vector<32x16xf32>
    %33 = arith.addf %30, %32 : vector<32x16xf32>
    %cst_16 = arith.constant dense<0xFF800000> : vector<32xf32>
    %34 = vector.multi_reduction <maximumf>, %33, %cst_16 [1] : vector<32x16xf32> to vector<32xf32>
    %35 = vector.shape_cast %34 : vector<32xf32> to vector<32x1xf32>
    %36 = vector.broadcast %35 : vector<32x1xf32> to vector<32x16xf32>
    %37 = arith.subf %33, %36 : vector<32x16xf32>
    %38 = math.exp %37 : vector<32x16xf32>
    %cst_17 = arith.constant dense<0.000000e+00> : vector<32xf32>
    %39 = vector.multi_reduction <add>, %38, %cst_17 [1] : vector<32x16xf32> to vector<32xf32>
    %40 = vector.shape_cast %39 : vector<32xf32> to vector<32x1xf32>
    %41 = tpu.reciprocal %40 {approx = true} : vector<32x1xf32> -> vector<32x1xf32>
    %42 = vector.broadcast %41 : vector<32x1xf32> to vector<32x16xf32>
    %43 = arith.mulf %38, %42 : vector<32x16xf32>
    %44 = vector.shape_cast %43 : vector<32x16xf32> to vector<1x32x16xf32>
    %cst_18 = arith.constant dense<0.000000e+00> : vector<1xf32>
    %45 = vector.multi_reduction <add>, %44, %cst_18 [1, 2] : vector<1x32x16xf32> to vector<1xf32>
    %46 = vector.shape_cast %45 : vector<1xf32> to vector<1x1x1xf32>
    %47 = vector.extract %46[0, 0, 0] : f32 from vector<1x1x1xf32>
    %cst_19 = arith.constant 5.120000e+02 : f32
    %48 = arith.divf %47, %cst_19 : f32
    %49 = arith.mulf %43, %43 : vector<32x16xf32>
    %50 = vector.shape_cast %49 : vector<32x16xf32> to vector<1x32x16xf32>
    %cst_20 = arith.constant dense<0.000000e+00> : vector<1xf32>
    %51 = vector.multi_reduction <add>, %50, %cst_20 [1, 2] : vector<1x32x16xf32> to vector<1xf32>
    %52 = vector.shape_cast %51 : vector<1xf32> to vector<1x1x1xf32>
    %53 = vector.extract %52[0, 0, 0] : f32 from vector<1x1x1xf32>
    %cst_21 = arith.constant 5.120000e+02 : f32
    %54 = arith.divf %53, %cst_21 : f32
    %55 = arith.mulf %48, %48 : f32
    %56 = arith.subf %54, %55 : f32
    %cst_22 = arith.constant 9.99999974E-6 : f32
    %57 = arith.addf %56, %cst_22 : f32
    %58 = math.rsqrt %57 : f32
    %59 = vector.broadcast %48 : f32 to vector<32x16xf32>
    %60 = arith.subf %43, %59 : vector<32x16xf32>
    %c0_23 = arith.constant 0 : index
    %c0_24 = arith.constant 0 : index
    %61 = vector.load %arg8[%c0_23, %c0_24] : memref<32x16xf32, #tpu.memory_space<vmem>>, vector<32x16xf32>
    %62 = vector.broadcast %58 : f32 to vector<32x16xf32>
    %63 = arith.mulf %62, %61 : vector<32x16xf32>
    %64 = arith.mulf %60, %63 : vector<32x16xf32>
    %c0_25 = arith.constant 0 : index
    %c0_26 = arith.constant 0 : index
    %65 = vector.load %arg9[%c0_25, %c0_26] : memref<32x16xf32, #tpu.memory_space<vmem>>, vector<32x16xf32>
    %66 = arith.addf %64, %65 : vector<32x16xf32>
    %c0_27 = arith.constant 0 : index
    %c0_28 = arith.constant 0 : index
    %67 = vector.load %arg10[%c0_27, %c0_28] : memref<32x32xbf16, #tpu.memory_space<vmem>>, vector<32x32xbf16>
    %68 = arith.truncf %66 : vector<32x16xf32> to vector<32x16xbf16>
    %cst_29 = arith.constant dense<0.000000e+00> : vector<32x16xf32>
    %69 = tpu.matmul %67, %68, %cst_29 {dimension_numbers = #tpu.dot_dimension_numbers<[1], [0], [0], [1], [0, 0, 1, 1], [], []>} : vector<32x32xbf16>, vector<32x16xbf16>, vector<32x16xf32> -> vector<32x16xf32>
    %c0_30 = arith.constant 0 : index
    %c0_31 = arith.constant 0 : index
    %70 = vector.load %arg11[%c0_30, %c0_31] : memref<32x1xf32, #tpu.memory_space<vmem>>, vector<32x1xf32>
    %71 = vector.broadcast %70 : vector<32x1xf32> to vector<32x16xf32>
    %72 = arith.addf %69, %71 : vector<32x16xf32>
    %c0_32 = arith.constant 0 : index
    %c0_33 = arith.constant 0 : index
    %73 = vector.load %arg12[%c0_32, %c0_33] : memref<32x32xbf16, #tpu.memory_space<vmem>>, vector<32x32xbf16>
    %74 = arith.truncf %72 : vector<32x16xf32> to vector<32x16xbf16>
    %cst_34 = arith.constant dense<0.000000e+00> : vector<32x16xf32>
    %75 = tpu.matmul %73, %74, %cst_34 {dimension_numbers = #tpu.dot_dimension_numbers<[1], [0], [0], [1], [0, 0, 1, 1], [], []>} : vector<32x32xbf16>, vector<32x16xbf16>, vector<32x16xf32> -> vector<32x16xf32>
    %c0_35 = arith.constant 0 : index
    %c0_36 = arith.constant 0 : index
    %76 = vector.load %arg13[%c0_35, %c0_36] : memref<32x1xf32, #tpu.memory_space<vmem>>, vector<32x1xf32>
    %77 = vector.broadcast %76 : vector<32x1xf32> to vector<32x16xf32>
    %78 = arith.addf %75, %77 : vector<32x16xf32>
    %c0_37 = arith.constant 0 : index
    %c0_38 = arith.constant 0 : index
    %c0_39 = arith.constant 0 : index
    %79 = vector.load %arg14[%c0_37, %c0_38, %c0_39] : memref<1x32x16xf32, #tpu.memory_space<vmem>>, vector<1x32x16xf32>
    %80 = vector.shape_cast %79 : vector<1x32x16xf32> to vector<32x16xf32>
    %81 = vector.shape_cast %78 : vector<32x16xf32> to vector<1x32x16xf32>
    tpu.vector_store %arg14[%c0_37, %c0_38, %c0_39], %81 {strides = array<i32>} : memref<1x32x16xf32, #tpu.memory_space<vmem>>, vector<1x32x16xf32>,
    return
  }
  func.func @transform_0(%arg0: i32) -> (i32, i32, i32) {
    %c0_i32 = arith.constant 0 : i32
    %c0_i32_0 = arith.constant 0 : i32
    %c0_i32_1 = arith.constant 0 : i32
    return %arg0, %c0_i32, %c0_i32_0 : i32, i32, i32
  }
  func.func @transform_1(%arg0: i32) -> (i32, i32, i32) {
    %c0_i32 = arith.constant 0 : i32
    %c0_i32_0 = arith.constant 0 : i32
    %c0_i32_1 = arith.constant 0 : i32
    return %arg0, %c0_i32, %c0_i32_0 : i32, i32, i32
  }
  func.func @transform_2(%arg0: i32) -> (i32, i32) {
    %c0_i32 = arith.constant 0 : i32
    %c0_i32_0 = arith.constant 0 : i32
    %c0_i32_1 = arith.constant 0 : i32
    return %c0_i32, %c0_i32_0 : i32, i32
  }
  func.func @transform_3(%arg0: i32) -> (i32, i32) {
    %c0_i32 = arith.constant 0 : i32
    %c0_i32_0 = arith.constant 0 : i32
    %c0_i32_1 = arith.constant 0 : i32
    return %c0_i32, %c0_i32_0 : i32, i32
  }
  func.func @transform_4(%arg0: i32) -> (i32, i32) {
    %c0_i32 = arith.constant 0 : i32
    %c0_i32_0 = arith.constant 0 : i32
    %c0_i32_1 = arith.constant 0 : i32
    return %c0_i32, %c0_i32_0 : i32, i32
  }
  func.func @transform_5(%arg0: i32) -> (i32, i32) {
    %c0_i32 = arith.constant 0 : i32
    %c0_i32_0 = arith.constant 0 : i32
    %c0_i32_1 = arith.constant 0 : i32
    return %c0_i32, %c0_i32_0 : i32, i32
  }
  func.func @transform_6(%arg0: i32) -> (i32, i32) {
    %c0_i32 = arith.constant 0 : i32
    %c0_i32_0 = arith.constant 0 : i32
    %c0_i32_1 = arith.constant 0 : i32
    return %c0_i32, %c0_i32_0 : i32, i32
  }
  func.func @transform_7(%arg0: i32) -> (i32, i32) {
    %c0_i32 = arith.constant 0 : i32
    %c0_i32_0 = arith.constant 0 : i32
    %c0_i32_1 = arith.constant 0 : i32
    return %c0_i32, %c0_i32_0 : i32, i32
  }
  func.func @transform_8(%arg0: i32) -> (i32, i32) {
    %c0_i32 = arith.constant 0 : i32
    %c0_i32_0 = arith.constant 0 : i32
    %c0_i32_1 = arith.constant 0 : i32
    return %c0_i32, %c0_i32_0 : i32, i32
  }
  func.func @transform_9(%arg0: i32) -> (i32, i32) {
    %c0_i32 = arith.constant 0 : i32
    %c0_i32_0 = arith.constant 0 : i32
    %c0_i32_1 = arith.constant 0 : i32
    return %c0_i32, %c0_i32_0 : i32, i32
  }
  func.func @transform_10(%arg0: i32) -> (i32, i32) {
    %c0_i32 = arith.constant 0 : i32
    %c0_i32_0 = arith.constant 0 : i32
    %c0_i32_1 = arith.constant 0 : i32
    return %c0_i32, %c0_i32_0 : i32, i32
  }
  func.func @transform_11(%arg0: i32) -> (i32, i32) {
    %c0_i32 = arith.constant 0 : i32
    %c0_i32_0 = arith.constant 0 : i32
    %c0_i32_1 = arith.constant 0 : i32
    return %c0_i32, %c0_i32_0 : i32, i32
  }
  func.func @transform_12(%arg0: i32) -> (i32, i32) {
    %c0_i32 = arith.constant 0 : i32
    %c0_i32_0 = arith.constant 0 : i32
    %c0_i32_1 = arith.constant 0 : i32
    return %c0_i32, %c0_i32_0 : i32, i32
  }
  func.func @transform_13(%arg0: i32) -> (i32, i32, i32) {
    %c0_i32 = arith.constant 0 : i32
    %c0_i32_0 = arith.constant 0 : i32
    %c0_i32_1 = arith.constant 0 : i32
    return %arg0, %c0_i32, %c0_i32_0 : i32, i32, i32
  }
}

</mosaic_0001>

<llo_original>
// kernel: tpu_custom_call.1
$region0: #{tpu_custom_call.1}
  #allocation0 [shape = 'u32[]', space=smem, size = 0x4, offset = 0x4, fixed_abs, tag = 'smem constant byte address 0x4 - core index']
  #allocation1 [shape = 'u32[72,128]{1,0:T(1,128)}', space=vmem, size = 0x9000, scoped, tag = 'internal scratch']
  %s0 = inlined_call_operand.vmem [shape: bf16[2,32,16], index: 0, kind: input, shape index: {}]
  %s1 = inlined_call_operand.vmem [shape: f32[2,3,16], index: 1, kind: input, shape index: {}]
  %s2 = inlined_call_operand.vmem [shape: bf16[32,32], index: 2, kind: input, shape index: {}]
  %s3 = inlined_call_operand.vmem [shape: f32[32,3], index: 3, kind: input, shape index: {}]
  %s4 = inlined_call_operand.vmem [shape: f32[32,1], index: 4, kind: input, shape index: {}]
  %s5 = inlined_call_operand.vmem [shape: bf16[32,32], index: 5, kind: input, shape index: {}]
  %s6 = inlined_call_operand.vmem [shape: f32[32,1], index: 6, kind: input, shape index: {}]
  %s7 = inlined_call_operand.vmem [shape: f32[32,16], index: 7, kind: input, shape index: {}]
  %s8 = inlined_call_operand.vmem [shape: f32[32,16], index: 8, kind: input, shape index: {}]
  %s9 = inlined_call_operand.vmem [shape: bf16[32,32], index: 9, kind: input, shape index: {}]
  %s10 = inlined_call_operand.vmem [shape: f32[32,1], index: 10, kind: input, shape index: {}]
  %s11 = inlined_call_operand.vmem [shape: bf16[32,32], index: 11, kind: input, shape index: {}]
  %s12 = inlined_call_operand.vmem [shape: f32[32,1], index: 12, kind: input, shape index: {}]
  %s13 = inlined_call_operand.vmem [shape: f32[2,32,16], index: 13, kind: output, shape index: {}]
  %s14 = sld [smem:[#allocation0]]
  $region85: #{tpu_custom_call.1} parent=0
    _
  %s16 = ssub.s32 1, %s14
  %s17 = scalar_select 0, %s16, %s14
  loop: start=0, step=1, limit=4
  $region2: #{tpu_custom_call.1} parent=0 // loop_pre_header
    _
  $region3: #{tpu_custom_call.1} parent=0 // loop_header
    %s19 = sphi 0, %s23
    %p20 = scmp.ge.s32.totalorder %s19, 4
    %s29 = sphi 0, %s31
    %s32 = sphi 0, %s29
    %s33 = sphi 0, %s32
    %s49 = sphi 0, %s33
    %s55 = sphi 0, %s57
    %s58 = sphi 0, %s55
    %s59 = sphi 0, %s58
    %s75 = sphi 0, %s59
    %s79 = sphi 0, %s79
    %s81 = sphi 0, %s79
    %s82 = sphi 0, %s81
    %s96 = sphi 0, %s82
    %s100 = sphi 0, %s100
    %s102 = sphi 0, %s100
    %s103 = sphi 0, %s102
    %s117 = sphi 0, %s103
    %s121 = sphi 0, %s121
    %s123 = sphi 0, %s121
    %s124 = sphi 0, %s123
    %s138 = sphi 0, %s124
    %s142 = sphi 0, %s142
    %s144 = sphi 0, %s142
    %s145 = sphi 0, %s144
    %s159 = sphi 0, %s145
    %s163 = sphi 0, %s163
    %s165 = sphi 0, %s163
    %s166 = sphi 0, %s165
    %s180 = sphi 0, %s166
    %s184 = sphi 0, %s184
    %s186 = sphi 0, %s184
    %s187 = sphi 0, %s186
    %s201 = sphi 0, %s187
    %s205 = sphi 0, %s205
    %s207 = sphi 0, %s205
    %s208 = sphi 0, %s207
    %s222 = sphi 0, %s208
    %s226 = sphi 0, %s226
    %s228 = sphi 0, %s226
    %s229 = sphi 0, %s228
    %s243 = sphi 0, %s229
    %s247 = sphi 0, %s247
    %s249 = sphi 0, %s247
    %s250 = sphi 0, %s249
    %s264 = sphi 0, %s250
    %s268 = sphi 0, %s268
    %s270 = sphi 0, %s268
    %s271 = sphi 0, %s270
    %s285 = sphi 0, %s271
    %s289 = sphi 0, %s289
    %s291 = sphi 0, %s289
    %s292 = sphi 0, %s291
    %s306 = sphi 0, %s292
    %s312 = sphi 0, %s314
    %s315 = sphi 0, %s312
    %s316 = sphi 0, %s315
    %s332 = sphi 0, %s316
  $region4: #{tpu_custom_call.1} parent=0 // loop_header_branch
    %22 = sbr.rel (%p20) target = $region8
  $region5: #{tpu_custom_call.1} parent=0 // loop_body
    %s24 = ssub.s32 %s19, 1
    %s25 = ssub.s32 %s19, 2
    %s26 = sadd.s32 %s19, 1
    %s27 = ssub.s32 %s19, %s26
    %p28 = scmp.eq.s32.totalorder %s27, 0
    %s30 = sadd.s32 %s29, 1
    %s31 = scalar_select %p28, %s29, %s30
    %p34 = pneg %p28
    %p35 = scmp.eq.s32.totalorder %s19, 1
    %p36 = por %p34, %p35
    %p37 = scmp.ne.s32.totalorder %s29, %s32
    %p38 = scmp.eq.s32.totalorder %s19, 0
    %p39 = por %p37, %p38
    %p40 = scmp.ne.s32.totalorder %s29, %s32
    %p41 = scmp.eq.s32.totalorder %s24, 1
    %p42 = por %p40, %p41
    %p43 = scmp.ne.s32.totalorder %s32, %s33
    %p44 = scmp.eq.s32.totalorder %s24, 0
    %p45 = por %p43, %p44
    %p46 = scmp.ne.s32.totalorder %s32, %s33
    %p47 = scmp.eq.s32.totalorder %s25, 1
    %p48 = por %p46, %p47
    %p50 = scmp.ne.s32.totalorder %s33, %s49
    %p51 = scmp.eq.s32.totalorder %s25, 0
    %p52 = por %p50, %p51
    %s53 = ssub.s32 %s19, %s26
    %p54 = scmp.eq.s32.totalorder %s53, 0
    %s56 = sadd.s32 %s55, 1
    %s57 = scalar_select %p54, %s55, %s56
    %p60 = pneg %p54
    %p61 = scmp.eq.s32.totalorder %s19, 1
    %p62 = por %p60, %p61
    %p63 = scmp.ne.s32.totalorder %s55, %s58
    %p64 = scmp.eq.s32.totalorder %s19, 0
    %p65 = por %p63, %p64
    %p66 = scmp.ne.s32.totalorder %s55, %s58
    %p67 = scmp.eq.s32.totalorder %s24, 1
    %p68 = por %p66, %p67
    %p69 = scmp.ne.s32.totalorder %s58, %s59
    %p70 = scmp.eq.s32.totalorder %s24, 0
    %p71 = por %p69, %p70
    %p72 = scmp.ne.s32.totalorder %s58, %s59
    %p73 = scmp.eq.s32.totalorder %s25, 1
    %p74 = por %p72, %p73
    %p76 = scmp.ne.s32.totalorder %s59, %s75
    %p77 = scmp.eq.s32.totalorder %s25, 0
    %p78 = por %p76, %p77
    %s80 = sadd.s32 %s79, 1
    %p83 = scmp.eq.s32.totalorder %s19, 1
    %p84 = scmp.ne.s32.totalorder %s79, %s81
    %p85 = scmp.eq.s32.totalorder %s19, 0
    %p86 = por %p84, %p85
    %p87 = scmp.ne.s32.totalorder %s79, %s81
    %p88 = scmp.eq.s32.totalorder %s24, 1
    %p89 = por %p87, %p88
    %p90 = scmp.ne.s32.totalorder %s81, %s82
    %p91 = scmp.eq.s32.totalorder %s24, 0
    %p92 = por %p90, %p91
    %p93 = scmp.ne.s32.totalorder %s81, %s82
    %p94 = scmp.eq.s32.totalorder %s25, 1
    %p95 = por %p93, %p94
    %p97 = scmp.ne.s32.totalorder %s82, %s96
    %p98 = scmp.eq.s32.totalorder %s25, 0
    %p99 = por %p97, %p98
    %s101 = sadd.s32 %s100, 1
    %p104 = scmp.eq.s32.totalorder %s19, 1
    %p105 = scmp.ne.s32.totalorder %s100, %s102
    %p106 = scmp.eq.s32.totalorder %s19, 0
    %p107 = por %p105, %p106
    %p108 = scmp.ne.s32.totalorder %s100, %s102
    %p109 = scmp.eq.s32.totalorder %s24, 1
    %p110 = por %p108, %p109
    %p111 = scmp.ne.s32.totalorder %s102, %s103
    %p112 = scmp.eq.s32.totalorder %s24, 0
    %p113 = por %p111, %p112
    %p114 = scmp.ne.s32.totalorder %s102, %s103
    %p115 = scmp.eq.s32.totalorder %s25, 1
    %p116 = por %p114, %p115
    %p118 = scmp.ne.s32.totalorder %s103, %s117
    %p119 = scmp.eq.s32.totalorder %s25, 0
    %p120 = por %p118, %p119
    %s122 = sadd.s32 %s121, 1
    %p125 = scmp.eq.s32.totalorder %s19, 1
    %p126 = scmp.ne.s32.totalorder %s121, %s123
    %p127 = scmp.eq.s32.totalorder %s19, 0
    %p128 = por %p126, %p127
    %p129 = scmp.ne.s32.totalorder %s121, %s123
    %p130 = scmp.eq.s32.totalorder %s24, 1
    %p131 = por %p129, %p130
    %p132 = scmp.ne.s32.totalorder %s123, %s124
    %p133 = scmp.eq.s32.totalorder %s24, 0
    %p134 = por %p132, %p133
    %p135 = scmp.ne.s32.totalorder %s123, %s124
    %p136 = scmp.eq.s32.totalorder %s25, 1
    %p137 = por %p135, %p136
    %p139 = scmp.ne.s32.totalorder %s124, %s138
    %p140 = scmp.eq.s32.totalorder %s25, 0
    %p141 = por %p139, %p140
    %s143 = sadd.s32 %s142, 1
    %p146 = scmp.eq.s32.totalorder %s19, 1
    %p147 = scmp.ne.s32.totalorder %s142, %s144
    %p148 = scmp.eq.s32.totalorder %s19, 0
    %p149 = por %p147, %p148
    %p150 = scmp.ne.s32.totalorder %s142, %s144
    %p151 = scmp.eq.s32.totalorder %s24, 1
    %p152 = por %p150, %p151
    %p153 = scmp.ne.s32.totalorder %s144, %s145
    %p154 = scmp.eq.s32.totalorder %s24, 0
    %p155 = por %p153, %p154
    %p156 = scmp.ne.s32.totalorder %s144, %s145
    %p157 = scmp.eq.s32.totalorder %s25, 1
    %p158 = por %p156, %p157
    %p160 = scmp.ne.s32.totalorder %s145, %s159
    %p161 = scmp.eq.s32.totalorder %s25, 0
    %p162 = por %p160, %p161
    %s164 = sadd.s32 %s163, 1
    %p167 = scmp.eq.s32.totalorder %s19, 1
    %p168 = scmp.ne.s32.totalorder %s163, %s165
    %p169 = scmp.eq.s32.totalorder %s19, 0
    %p170 = por %p168, %p169
    %p171 = scmp.ne.s32.totalorder %s163, %s165
    %p172 = scmp.eq.s32.totalorder %s24, 1
    %p173 = por %p171, %p172
    %p174 = scmp.ne.s32.totalorder %s165, %s166
    %p175 = scmp.eq.s32.totalorder %s24, 0
    %p176 = por %p174, %p175
    %p177 = scmp.ne.s32.totalorder %s165, %s166
    %p178 = scmp.eq.s32.totalorder %s25, 1
    %p179 = por %p177, %p178
    %p181 = scmp.ne.s32.totalorder %s166, %s180
    %p182 = scmp.eq.s32.totalorder %s25, 0
    %p183 = por %p181, %p182
    %s185 = sadd.s32 %s184, 1
    %p188 = scmp.eq.s32.totalorder %s19, 1
    %p189 = scmp.ne.s32.totalorder %s184, %s186
    %p190 = scmp.eq.s32.totalorder %s19, 0
    %p191 = por %p189, %p190
    %p192 = scmp.ne.s32.totalorder %s184, %s186
    %p193 = scmp.eq.s32.totalorder %s24, 1
    %p194 = por %p192, %p193
    %p195 = scmp.ne.s32.totalorder %s186, %s187
    %p196 = scmp.eq.s32.totalorder %s24, 0
    %p197 = por %p195, %p196
    %p198 = scmp.ne.s32.totalorder %s186, %s187
    %p199 = scmp.eq.s32.totalorder %s25, 1
    %p200 = por %p198, %p199
    %p202 = scmp.ne.s32.totalorder %s187, %s201
    %p203 = scmp.eq.s32.totalorder %s25, 0
    %p204 = por %p202, %p203
    %s206 = sadd.s32 %s205, 1
    %p209 = scmp.eq.s32.totalorder %s19, 1
    %p210 = scmp.ne.s32.totalorder %s205, %s207
    %p211 = scmp.eq.s32.totalorder %s19, 0
    %p212 = por %p210, %p211
    %p213 = scmp.ne.s32.totalorder %s205, %s207
    %p214 = scmp.eq.s32.totalorder %s24, 1
    %p215 = por %p213, %p214
    %p216 = scmp.ne.s32.totalorder %s207, %s208
    %p217 = scmp.eq.s32.totalorder %s24, 0
    %p218 = por %p216, %p217
    %p219 = scmp.ne.s32.totalorder %s207, %s208
    %p220 = scmp.eq.s32.totalorder %s25, 1
    %p221 = por %p219, %p220
    %p223 = scmp.ne.s32.totalorder %s208, %s222
    %p224 = scmp.eq.s32.totalorder %s25, 0
    %p225 = por %p223, %p224
    %s227 = sadd.s32 %s226, 1
    %p230 = scmp.eq.s32.totalorder %s19, 1
    %p231 = scmp.ne.s32.totalorder %s226, %s228
    %p232 = scmp.eq.s32.totalorder %s19, 0
    %p233 = por %p231, %p232
    %p234 = scmp.ne.s32.totalorder %s226, %s228
    %p235 = scmp.eq.s32.totalorder %s24, 1
    %p236 = por %p234, %p235
    %p237 = scmp.ne.s32.totalorder %s228, %s229
    %p238 = scmp.eq.s32.totalorder %s24, 0
    %p239 = por %p237, %p238
    %p240 = scmp.ne.s32.totalorder %s228, %s229
    %p241 = scmp.eq.s32.totalorder %s25, 1
    %p242 = por %p240, %p241
    %p244 = scmp.ne.s32.totalorder %s229, %s243
    %p245 = scmp.eq.s32.totalorder %s25, 0
    %p246 = por %p244, %p245
    %s248 = sadd.s32 %s247, 1
    %p251 = scmp.eq.s32.totalorder %s19, 1
    %p252 = scmp.ne.s32.totalorder %s247, %s249
    %p253 = scmp.eq.s32.totalorder %s19, 0
    %p254 = por %p252, %p253
    %p255 = scmp.ne.s32.totalorder %s247, %s249
    %p256 = scmp.eq.s32.totalorder %s24, 1
    %p257 = por %p255, %p256
    %p258 = scmp.ne.s32.totalorder %s249, %s250
    %p259 = scmp.eq.s32.totalorder %s24, 0
    %p260 = por %p258, %p259
    %p261 = scmp.ne.s32.totalorder %s249, %s250
    %p262 = scmp.eq.s32.totalorder %s25, 1
    %p263 = por %p261, %p262
    %p265 = scmp.ne.s32.totalorder %s250, %s264
    %p266 = scmp.eq.s32.totalorder %s25, 0
    %p267 = por %p265, %p266
    %s269 = sadd.s32 %s268, 1
    %p272 = scmp.eq.s32.totalorder %s19, 1
    %p273 = scmp.ne.s32.totalorder %s268, %s270
    %p274 = scmp.eq.s32.totalorder %s19, 0
    %p275 = por %p273, %p274
    %p276 = scmp.ne.s32.totalorder %s268, %s270
    %p277 = scmp.eq.s32.totalorder %s24, 1
    %p278 = por %p276, %p277
    %p279 = scmp.ne.s32.totalorder %s270, %s271
    %p280 = scmp.eq.s32.totalorder %s24, 0
    %p281 = por %p279, %p280
    %p282 = scmp.ne.s32.totalorder %s270, %s271
    %p283 = scmp.eq.s32.totalorder %s25, 1
    %p284 = por %p282, %p283
    %p286 = scmp.ne.s32.totalorder %s271, %s285
    %p287 = scmp.eq.s32.totalorder %s25, 0
    %p288 = por %p286, %p287
    %s290 = sadd.s32 %s289, 1
    %p293 = scmp.eq.s32.totalorder %s19, 1
    %p294 = scmp.ne.s32.totalorder %s289, %s291
    %p295 = scmp.eq.s32.totalorder %s19, 0
    %p296 = por %p294, %p295
    %p297 = scmp.ne.s32.totalorder %s289, %s291
    %p298 = scmp.eq.s32.totalorder %s24, 1
    %p299 = por %p297, %p298
    %p300 = scmp.ne.s32.totalorder %s291, %s292
    %p301 = scmp.eq.s32.totalorder %s24, 0
    %p302 = por %p300, %p301
    %p303 = scmp.ne.s32.totalorder %s291, %s292
    %p304 = scmp.eq.s32.totalorder %s25, 1
    %p305 = por %p303, %p304
    %p307 = scmp.ne.s32.totalorder %s292, %s306
    %p308 = scmp.eq.s32.totalorder %s25, 0
    %p309 = por %p307, %p308
    %s310 = ssub.s32 %s19, %s26
    %p311 = scmp.eq.s32.totalorder %s310, 0
    %s313 = sadd.s32 %s312, 1
    %s314 = scalar_select %p311, %s312, %s313
    %p317 = pneg %p311
    %p318 = scmp.eq.s32.totalorder %s19, 1
    %p319 = por %p317, %p318
    %p320 = scmp.ne.s32.totalorder %s312, %s315
    %p321 = scmp.eq.s32.totalorder %s19, 0
    %p322 = por %p320, %p321
    %p323 = scmp.ne.s32.totalorder %s312, %s315
    %p324 = scmp.eq.s32.totalorder %s24, 1
    %p325 = por %p323, %p324
    %p326 = scmp.ne.s32.totalorder %s315, %s316
    %p327 = scmp.eq.s32.totalorder %s24, 0
    %p328 = por %p326, %p327
    %p329 = scmp.ne.s32.totalorder %s315, %s316
    %p330 = scmp.eq.s32.totalorder %s25, 1
    %p331 = por %p329, %p330
    %p333 = scmp.ne.s32.totalorder %s316, %s332
    %p334 = scmp.eq.s32.totalorder %s25, 0
    %p335 = por %p333, %p334
    %p336 = scmp.le.s32.totalorder 1, %s19
    %p337 = scmp.lt.s32.totalorder %s19, 3
    %p338 = pnand %p336, %p337
    %p339 = pneg %p338
    // Predicated region
    $region9: #{tpu_custom_call.1} parent=5 // pred_check
      _
    $region10: #{tpu_custom_call.1} parent=5 // pred_check_branch
      %341 = sbr.rel (%p338) target = $region12
    $region11: #{tpu_custom_call.1} parent=5 // pred_region
      %s342 = ssub.s32 %s19, 1
      // Predicated region
      $region13: #{tpu_custom_call.1} parent=11 // pred_check
        %p343 = pneg %p92
      $region14: #{tpu_custom_call.1} parent=11 // pred_check_branch
        %345 = sbr.rel (%p343) target = $region16
      $region15: #{tpu_custom_call.1} parent=11 // pred_region
        _
      $region16: #{tpu_custom_call.1} parent=11 // pred_fallthru
        _
      // Predicated region
      $region17: #{tpu_custom_call.1} parent=11 // pred_check
        %p346 = pneg %p113
      $region18: #{tpu_custom_call.1} parent=11 // pred_check_branch
        %348 = sbr.rel (%p346) target = $region20
      $region19: #{tpu_custom_call.1} parent=11 // pred_region
        _
      $region20: #{tpu_custom_call.1} parent=11 // pred_fallthru
        _
      // Predicated region
      $region21: #{tpu_custom_call.1} parent=11 // pred_check
        %p349 = pneg %p134
      $region22: #{tpu_custom_call.1} parent=11 // pred_check_branch
        %351 = sbr.rel (%p349) target = $region24
      $region23: #{tpu_custom_call.1} parent=11 // pred_region
        _
      $region24: #{tpu_custom_call.1} parent=11 // pred_fallthru
        _
      // Predicated region
      $region25: #{tpu_custom_call.1} parent=11 // pred_check
        %p352 = pneg %p155
      $region26: #{tpu_custom_call.1} parent=11 // pred_check_branch
        %354 = sbr.rel (%p352) target = $region28
      $region27: #{tpu_custom_call.1} parent=11 // pred_region
        _
      $region28: #{tpu_custom_call.1} parent=11 // pred_fallthru
        _
      // Predicated region
      $region29: #{tpu_custom_call.1} parent=11 // pred_check
        %p355 = pneg %p176
      $region30: #{tpu_custom_call.1} parent=11 // pred_check_branch
        %357 = sbr.rel (%p355) target = $region32
      $region31: #{tpu_custom_call.1} parent=11 // pred_region
        _
      $region32: #{tpu_custom_call.1} parent=11 // pred_fallthru
        _
      // Predicated region
      $region33: #{tpu_custom_call.1} parent=11 // pred_check
        %p358 = pneg %p197
      $region34: #{tpu_custom_call.1} parent=11 // pred_check_branch
        %360 = sbr.rel (%p358) target = $region36
      $region35: #{tpu_custom_call.1} parent=11 // pred_region
        _
      $region36: #{tpu_custom_call.1} parent=11 // pred_fallthru
        _
      // Predicated region
      $region37: #{tpu_custom_call.1} parent=11 // pred_check
        %p361 = pneg %p218
      $region38: #{tpu_custom_call.1} parent=11 // pred_check_branch
        %363 = sbr.rel (%p361) target = $region40
      $region39: #{tpu_custom_call.1} parent=11 // pred_region
        _
      $region40: #{tpu_custom_call.1} parent=11 // pred_fallthru
        _
      // Predicated region
      $region41: #{tpu_custom_call.1} parent=11 // pred_check
        %p364 = pneg %p239
      $region42: #{tpu_custom_call.1} parent=11 // pred_check_branch
        %366 = sbr.rel (%p364) target = $region44
      $region43: #{tpu_custom_call.1} parent=11 // pred_region
        _
      $region44: #{tpu_custom_call.1} parent=11 // pred_fallthru
        _
      // Predicated region
      $region45: #{tpu_custom_call.1} parent=11 // pred_check
        %p367 = pneg %p260
      $region46: #{tpu_custom_call.1} parent=11 // pred_check_branch
        %369 = sbr.rel (%p367) target = $region48
      $region47: #{tpu_custom_call.1} parent=11 // pred_region
        _
      $region48: #{tpu_custom_call.1} parent=11 // pred_fallthru
        _
      // Predicated region
      $region49: #{tpu_custom_call.1} parent=11 // pred_check
        %p370 = pneg %p281
      $region50: #{tpu_custom_call.1} parent=11 // pred_check_branch
        %372 = sbr.rel (%p370) target = $region52
      $region51: #{tpu_custom_call.1} parent=11 // pred_region
        _
      $region52: #{tpu_custom_call.1} parent=11 // pred_fallthru
        _
      // Predicated region
      $region53: #{tpu_custom_call.1} parent=11 // pred_check
        %p373 = pneg %p302
      $region54: #{tpu_custom_call.1} parent=11 // pred_check_branch
        %375 = sbr.rel (%p373) target = $region56
      $region55: #{tpu_custom_call.1} parent=11 // pred_region
        _
      $region56: #{tpu_custom_call.1} parent=11 // pred_fallthru
        _
    $region12: #{tpu_custom_call.1} parent=5 // pred_fallthru
      _
    %p376 = scmp.lt.s32.totalorder %s19, 2
    // Predicated region
    $region57: #{tpu_custom_call.1} parent=5 // pred_check
      %p377 = pneg %p376
    $region58: #{tpu_custom_call.1} parent=5 // pred_check_branch
      %379 = sbr.rel (%p377) target = $region60
    $region59: #{tpu_custom_call.1} parent=5 // pred_region
      // Predicated region
      $region61: #{tpu_custom_call.1} parent=59 // pred_check
        %p380 = pneg %p39
      $region62: #{tpu_custom_call.1} parent=59 // pred_check_branch
        %382 = sbr.rel (%p380) target = $region64
      $region63: #{tpu_custom_call.1} parent=59 // pred_region
        %p383 = scmp.lt.s32.totalorder %s19, 1
        %s384 = scalar_select %p383, %s19, 1
        %s385 = smul.addr %s384, 4
        %s386 = smul.addr %s385, 4
        %s387 = scalar_lea.vmem %s0, %s386
      $region64: #{tpu_custom_call.1} parent=59 // pred_fallthru
        _
      // Predicated region
      $region65: #{tpu_custom_call.1} parent=59 // pred_check
        %p388 = pneg %p65
      $region66: #{tpu_custom_call.1} parent=59 // pred_check_branch
        %390 = sbr.rel (%p388) target = $region68
      $region67: #{tpu_custom_call.1} parent=59 // pred_region
        %p391 = scmp.lt.s32.totalorder %s19, 1
        %s392 = scalar_select %p391, %s19, 1
        %s393 = smul.addr %s392, 4
        %s394 = scalar_lea.vmem %s1, %s393
      $region68: #{tpu_custom_call.1} parent=59 // pred_fallthru
        _
    $region60: #{tpu_custom_call.1} parent=5 // pred_fallthru
      _
    %p395 = scmp.le.s32.totalorder 1, %s19
    %p396 = scmp.lt.s32.totalorder %s19, 3
    %p397 = pnand %p395, %p396
    %p398 = pneg %p397
    // Predicated region
    $region69: #{tpu_custom_call.1} parent=5 // pred_check
      _
    $region70: #{tpu_custom_call.1} parent=5 // pred_check_branch
      %400 = sbr.rel (%p397) target = $region72
    $region71: #{tpu_custom_call.1} parent=5 // pred_region
      %s401 = ssub.s32 %s19, 1
      %p402 = scmp.lt.s32.totalorder %s24, 1
      %s403 = scalar_select %p402, %s24, 1
      %s404 = smul.addr %s403, 4
      %s405 = smul.addr %s404, 4
      %s406 = scalar_lea.vmem %s0, %s405
      %p407 = pneg %p45
      %p408 = pneg %p42
      %p409 = scmp.lt.s32.totalorder %s24, 1
      %s410 = scalar_select %p409, %s24, 1
      %s411 = smul.addr %s410, 4
      %s412 = scalar_lea.vmem %s1, %s411
      %p413 = pneg %p71
      %p414 = pneg %p68
      %p415 = pneg %p92
      %p416 = pneg %p89
      %p417 = pneg %p113
      %p418 = pneg %p110
      %p419 = pneg %p134
      %p420 = pneg %p131
      %p421 = pneg %p155
      %p422 = pneg %p152
      %p423 = pneg %p176
      %p424 = pneg %p173
      %p425 = pneg %p197
      %p426 = pneg %p194
      %p427 = pneg %p218
      %p428 = pneg %p215
      %p429 = pneg %p239
      %p430 = pneg %p236
      %p431 = pneg %p260
      %p432 = pneg %p257
      %p433 = pneg %p281
      %p434 = pneg %p278
      %p435 = pneg %p302
      %p436 = pneg %p299
      %p437 = pneg %p328
      %p438 = pneg %p325
      %p439 = scmp.lt.s32.totalorder %s24, 1
      %s440 = scalar_select %p439, %s24, 1
      %s441 = smul.addr %s440, 4
      %s442 = smul.addr %s441, 8
      %s443 = scalar_lea.vmem %s13, %s442
      %p444 = scmp.lt.s32.totalorder %s24, 1
      %s445 = scalar_select %p444, %s24, 1
      %s446 = smul.addr %s445, 4
      %s447 = smul.addr %s446, 4
      %s448 = scalar_lea.vmem %s0, %s447
      %p449 = scmp.lt.s32.totalorder %s24, 1
      %s450 = scalar_select %p449, %s24, 1
      %s451 = smul.addr %s450, 4
      %s452 = scalar_lea.vmem %s1, %s451
      %p453 = scmp.lt.s32.totalorder %s24, 1
      %s454 = scalar_select %p453, %s24, 1
      %s455 = smul.addr %s454, 4
      %s456 = smul.addr %s455, 8
      %s457 = scalar_lea.vmem %s13, %s456
      %v459 = vld [vmem:[%s448] sm:$0xf]
      %v460 = vld [vmem:[%s448 + $0x4] sm:$0xf]
      %v461 = vld [vmem:[%s448 + $0x8] sm:$0xf]
      %v462 = vld [vmem:[%s448 + $0xc] sm:$0xf]
      %v463 = vld [vmem:[%s452] sm:$0x7]
      %v464 = vld [vmem:[%s2] sm:$0xf]
      %v465 = vld [vmem:[%s2 + $0x4] sm:$0xf]
      %v466 = vld [vmem:[%s2 + $0x8] sm:$0xf]
      %v467 = vld [vmem:[%s2 + $0xc] sm:$0xf]
      %v468 = vld [vmem:[%s3] sm:$0xff]
      %v469 = vld [vmem:[%s3 + $0x8] sm:$0xff]
      %v470 = vld [vmem:[%s3 + $0x10] sm:$0xff]
      %v471 = vld [vmem:[%s3 + $0x18] sm:$0xff]
      %473 = vset.pattern.permute.xlu0 0
      %474 = vperm.xlu0 %473, %v468
      %v475 = vpop.permute.xlu0 %474
      %478 = vset.pattern.permute.xlu0 0
      %479 = vperm.xlu0 %478, %v469
      %v480 = vpop.permute.xlu0 %479
      %483 = vset.pattern.permute.xlu0 0
      %484 = vperm.xlu0 %483, %v470
      %v485 = vpop.permute.xlu0 %484
      %488 = vset.pattern.permute.xlu0 0
      %489 = vperm.xlu0 %488, %v471
      %v490 = vpop.permute.xlu0 %489
      %v492 = vperm.slane %v463, 0
      %v493 = vmul.f32 %v475, %v492
      %v494 = vmul.f32 %v480, %v492
      %v495 = vmul.f32 %v485, %v492
      %v496 = vmul.f32 %v490, %v492
      %v501 = vunpack.c.l.b16 %v464
      %v502 = vunpack.c.l.b16 %v465
      %v503 = vunpack.c.l.b16 %v466
      %v504 = vunpack.c.l.b16 %v467
      %v505 = vpack.c.b16 %v502, %v501
      %v506 = vpack.c.b16 %v504, %v503
      %v511 = vunpack.c.l.b16 %v459
      %v512 = vunpack.c.l.b16 %v460
      %v513 = vunpack.c.l.b16 %v461
      %v514 = vunpack.c.l.b16 %v462
      %v515 = vpack.c.b16 %v512, %v511
      %v516 = vpack.c.b16 %v514, %v513
      %vm519 = vcmask 261120
      %v521 = vsel %vm519, %v505, 0
      %v524 = vsel %vm519, %v506, 0
      %526 = vmatpush.bf16.msra.mxu0 0
      %527 = vmatpush.bf16.msra.mxu0 0
      %528 = vmatpush.bf16.msra.mxu0 0
      %529 = vmatpush.bf16.msra.mxu0 0
      %530 = vmatpush.bf16.msra.mxu0 0
      %531 = vmatpush.bf16.msra.mxu0 0
      %532 = vmatpush.bf16.msra.mxu0 %v516
      %533 = vmatpush.bf16.msra.mxu0 %v515
      %534 = vmatmul.bf16.gmra.mxu0 %v521
      %v535 = vpop.f32.mrf.mxu0
      %v536 = vadd.f32 %v493, %v535
      %v537 = vpop.f32.mrf.mxu0
      %v538 = vadd.f32 %v494, %v537
      %539 = vmatmul.bf16.gmra.mxu0 %v524
      %v540 = vpop.f32.mrf.mxu0
      %v541 = vadd.f32 %v495, %v540
      %v542 = vpop.f32.mrf.mxu0
      %v543 = vadd.f32 %v496, %v542
      %544 = vdwg.mxu0
      %545 = vset.pattern.permute.xlu0 1
      %546 = vperm.xlu0 %545, %v468
      %v547 = vpop.permute.xlu0 %546
      %549 = vset.pattern.permute.xlu0 1
      %550 = vperm.xlu0 %549, %v469
      %v551 = vpop.permute.xlu0 %550
      %553 = vset.pattern.permute.xlu0 1
      %554 = vperm.xlu0 %553, %v470
      %v555 = vpop.permute.xlu0 %554
      %557 = vset.pattern.permute.xlu0 1
      %558 = vperm.xlu0 %557, %v471
      %v559 = vpop.permute.xlu0 %558
      %v561 = vperm.slane %v463, 1
      %v562 = vmul.f32 %v547, %v561
      %v563 = vmul.f32 %v551, %v561
      %v564 = vmul.f32 %v555, %v561
      %v565 = vmul.f32 %v559, %v561
      %v566 = vadd.f32 %v536, %v562
      %v567 = vadd.f32 %v538, %v563
      %v568 = vadd.f32 %v541, %v564
      %v569 = vadd.f32 %v543, %v565
      %570 = vset.pattern.permute.xlu0 2
      %571 = vperm.xlu0 %570, %v468
      %v572 = vpop.permute.xlu0 %571
      %574 = vset.pattern.permute.xlu0 2
      %575 = vperm.xlu0 %574, %v469
      %v576 = vpop.permute.xlu0 %575
      %578 = vset.pattern.permute.xlu0 2
      %579 = vperm.xlu0 %578, %v470
      %v580 = vpop.permute.xlu0 %579
      %582 = vset.pattern.permute.xlu0 2
      %583 = vperm.xlu0 %582, %v471
      %v584 = vpop.permute.xlu0 %583
      %v586 = vperm.slane %v463, 2
      %v587 = vmul.f32 %v572, %v586
      %v588 = vmul.f32 %v576, %v586
      %v589 = vmul.f32 %v580, %v586
      %v590 = vmul.f32 %v584, %v586
      %v591 = vadd.f32 %v566, %v587
      %v592 = vadd.f32 %v567, %v588
      %v593 = vadd.f32 %v568, %v589
      %v594 = vadd.f32 %v569, %v590
      %v595 = vld [vmem:[%s4] sm:$0xff]
      %v596 = vld [vmem:[%s4 + $0x8] sm:$0xff]
      %v597 = vld [vmem:[%s4 + $0x10] sm:$0xff]
      %v598 = vld [vmem:[%s4 + $0x18] sm:$0xff]
      %600 = vset.pattern.permute.xlu0 0
      %601 = vperm.xlu0 %600, %v595
      %v602 = vpop.permute.xlu0 %601
      %605 = vset.pattern.permute.xlu0 0
      %606 = vperm.xlu0 %605, %v596
      %v607 = vpop.permute.xlu0 %606
      %610 = vset.pattern.permute.xlu0 0
      %611 = vperm.xlu0 %610, %v597
      %v612 = vpop.permute.xlu0 %611
      %615 = vset.pattern.permute.xlu0 0
      %616 = vperm.xlu0 %615, %v598
      %v617 = vpop.permute.xlu0 %616
      %v619 = vadd.f32 %v591, %v602
      %v620 = vadd.f32 %v592, %v607
      %v621 = vadd.f32 %v593, %v612
      %v622 = vadd.f32 %v594, %v617
      %v623 = vld [vmem:[%s5] sm:$0xf]
      %v624 = vld [vmem:[%s5 + $0x4] sm:$0xf]
      %v625 = vld [vmem:[%s5 + $0x8] sm:$0xf]
      %v626 = vld [vmem:[%s5 + $0xc] sm:$0xf]
      %v627 = vpack.c.bf16 %v620, %v619
      %v628 = vpack.c.bf16 %v622, %v621
      %v629 = vld [vmem:[%s6] sm:$0xff]
      %v630 = vld [vmem:[%s6 + $0x8] sm:$0xff]
      %v631 = vld [vmem:[%s6 + $0x10] sm:$0xff]
      %v632 = vld [vmem:[%s6 + $0x18] sm:$0xff]
      %634 = vset.pattern.permute.xlu0 0
      %635 = vperm.xlu0 %634, %v629
      %v636 = vpop.permute.xlu0 %635
      %639 = vset.pattern.permute.xlu0 0
      %640 = vperm.xlu0 %639, %v630
      %v641 = vpop.permute.xlu0 %640
      %644 = vset.pattern.permute.xlu0 0
      %645 = vperm.xlu0 %644, %v631
      %v646 = vpop.permute.xlu0 %645
      %649 = vset.pattern.permute.xlu0 0
      %650 = vperm.xlu0 %649, %v632
      %v651 = vpop.permute.xlu0 %650
      %v657 = vunpack.c.l.b16 %v623
      %v658 = vunpack.c.l.b16 %v624
      %v659 = vunpack.c.l.b16 %v625
      %v660 = vunpack.c.l.b16 %v626
      %v661 = vpack.c.b16 %v658, %v657
      %v662 = vpack.c.b16 %v660, %v659
      %v664 = vsel %vm519, %v661, 0
      %v667 = vsel %vm519, %v662, 0
      %669 = vmatpush.bf16.msra.mxu0 0
      %670 = vmatpush.bf16.msra.mxu0 0
      %671 = vmatpush.bf16.msra.mxu0 0
      %672 = vmatpush.bf16.msra.mxu0 0
      %673 = vmatpush.bf16.msra.mxu0 0
      %674 = vmatpush.bf16.msra.mxu0 0
      %675 = vmatpush.bf16.msra.mxu0 %v628
      %676 = vmatpush.bf16.msra.mxu0 %v627
      %677 = vmatmul.bf16.gmra.mxu0 %v664
      %v678 = vpop.f32.mrf.mxu0
      %v679 = vadd.f32 %v636, %v678
      %v680 = vpop.f32.mrf.mxu0
      %v681 = vadd.f32 %v641, %v680
      %682 = vmatmul.bf16.gmra.mxu0 %v667
      %v683 = vpop.f32.mrf.mxu0
      %v684 = vadd.f32 %v646, %v683
      %v685 = vpop.f32.mrf.mxu0
      %v686 = vadd.f32 %v651, %v685
      %687 = vdwg.mxu0
      %vm688 = vcmask 130048
      %v689 = vsel %vm688, %v679, -inf
      %690 = vmax.xlane.f32.xlu0 %v689
      %v691 = vpop.xlane.xlu0 %690
      %v692 = vsel %vm688, %v681, -inf
      %693 = vmax.xlane.f32.xlu0 %v692
      %v694 = vpop.xlane.xlu0 %693
      %v695 = vsel %vm688, %v684, -inf
      %696 = vmax.xlane.f32.xlu0 %v695
      %v697 = vpop.xlane.xlu0 %696
      %v698 = vsel %vm688, %v686, -inf
      %699 = vmax.xlane.f32.xlu0 %v698
      %v700 = vpop.xlane.xlu0 %699
      %v701 = vsub.f32 %v679, %v691
      %v702 = vsub.f32 %v681, %v694
      %v703 = vsub.f32 %v684, %v697
      %v704 = vsub.f32 %v686, %v700
      %v705 = vmul.f32 %v701, 1.442695
      %v706 = vpow.pop %v705
      %v707 = vmul.f32 %v702, 1.442695
      %v708 = vpow.pop %v707
      %v709 = vmul.f32 %v703, 1.442695
      %v710 = vpow.pop %v709
      %v711 = vmul.f32 %v704, 1.442695
      %v712 = vpow.pop %v711
      %v713 = vsel %vm688, %v706, 0.0
      %714 = vadd.xlane.f32.xlu0 %v713
      %v715 = vpop.xlane.xlu0 %714
      %v716 = vsel %vm688, %v708, 0.0
      %717 = vadd.xlane.f32.xlu0 %v716
      %v718 = vpop.xlane.xlu0 %717
      %v719 = vsel %vm688, %v710, 0.0
      %720 = vadd.xlane.f32.xlu0 %v719
      %v721 = vpop.xlane.xlu0 %720
      %v722 = vsel %vm688, %v712, 0.0
      %723 = vadd.xlane.f32.xlu0 %v722
      %v724 = vpop.xlane.xlu0 %723
      %v725 = vrcp.pop %v715
      %v726 = vrcp.pop %v718
      %v727 = vrcp.pop %v721
      %v728 = vrcp.pop %v724
      %v729 = vmul.f32 %v706, %v725
      %v730 = vmul.f32 %v708, %v726
      %v731 = vmul.f32 %v710, %v727
      %v732 = vmul.f32 %v712, %v728
      %v733 = vsel %vm688, %v729, 0.0
      %v734 = vsel %vm688, %v730, 0.0
      %v735 = vadd.f32 %v733, %v734
      %v736 = vsel %vm688, %v731, 0.0
      %v737 = vadd.f32 %v735, %v736
      %v738 = vsel %vm688, %v732, 0.0
      %v739 = vadd.f32 %v737, %v738
      %740 = vadd.xlane.f32.xlu0 %v739
      %v741 = vpop.xlane.xlu0 %740
      %v742 = vrot.slane %v741, 4
      %v743 = vadd.f32 %v741, %v742
      %v744 = vrot.slane %v743, 2
      %v745 = vadd.f32 %v743, %v744
      %v746 = vrot.slane %v745, 1
      %v747 = vadd.f32 %v745, %v746
      %s748 = vtos %v747
      %v749 = vrcp.pop 512.0
      %v750 = vmul.f32 512.0, %v749
      %v751 = vsub.f32 1.0, %v750
      %v752 = vmul.f32 %v749, %v751
      %v753 = vadd.f32 %v749, %v752
      %vm754 = vweird.f32 %v749
      %v755 = vsel %vm754, %v749, %v753
      %s756 = vtos %v755
      %s757 = smul.f32 %s748, %s756
      %v758 = vmul.f32 %v729, %v729
      %v759 = vmul.f32 %v730, %v730
      %v760 = vmul.f32 %v731, %v731
      %v761 = vmul.f32 %v732, %v732
      %v762 = vsel %vm688, %v758, 0.0
      %v763 = vsel %vm688, %v759, 0.0
      %v764 = vadd.f32 %v762, %v763
      %v765 = vsel %vm688, %v760, 0.0
      %v766 = vadd.f32 %v764, %v765
      %v767 = vsel %vm688, %v761, 0.0
      %v768 = vadd.f32 %v766, %v767
      %769 = vadd.xlane.f32.xlu0 %v768
      %v770 = vpop.xlane.xlu0 %769
      %v771 = vrot.slane %v770, 4
      %v772 = vadd.f32 %v770, %v771
      %v773 = vrot.slane %v772, 2
      %v774 = vadd.f32 %v772, %v773
      %v775 = vrot.slane %v774, 1
      %v776 = vadd.f32 %v774, %v775
      %s777 = vtos %v776
      %v778 = vrcp.pop 512.0
      %v779 = vmul.f32 512.0, %v778
      %v780 = vsub.f32 1.0, %v779
      %v781 = vmul.f32 %v778, %v780
      %v782 = vadd.f32 %v778, %v781
      %vm783 = vweird.f32 %v778
      %v784 = vsel %vm783, %v778, %v782
      %s785 = vtos %v784
      %s786 = smul.f32 %s777, %s785
      %s787 = smul.f32 %s757, %s757
      %s788 = ssub.f32 %s786, %s787
      %s789 = sadd.f32 %s788, 1e-05
      %v790 = vstv %s789
      %v791 = vrsqrt.pop %v790
      %v792 = vmul.f32 %v791, %v790
      %v793 = vmul.f32 %v792, %v791
      %v794 = vmul.f32 0.5, %v793
      %v795 = vsub.f32 1.5, %v794
      %v796 = vmul.f32 %v791, %v795
      %vm797 = vweird.f32 %v790
      %vm798 = vweird.f32 %v791
      %vm799 = vmor %vm797, %vm798
      %v800 = vsel %vm799, %v791, %v796
      %s801 = vtos %v800
      %v802 = vstv %s757
      %v803 = vsub.f32 %v729, %v802
      %v804 = vsub.f32 %v730, %v802
      %v805 = vsub.f32 %v731, %v802
      %v806 = vsub.f32 %v732, %v802
      %v807 = vld [vmem:[%s7] sm:$0xff]
      %v808 = vld [vmem:[%s7 + $0x8] sm:$0xff]
      %v809 = vld [vmem:[%s7 + $0x10] sm:$0xff]
      %v810 = vld [vmem:[%s7 + $0x18] sm:$0xff]
      %v811 = vstv %s801
      %v812 = vmul.f32 %v811, %v807
      %v813 = vmul.f32 %v811, %v808
      %v814 = vmul.f32 %v811, %v809
      %v815 = vmul.f32 %v811, %v810
      %v816 = vmul.f32 %v803, %v812
      %v817 = vmul.f32 %v804, %v813
      %v818 = vmul.f32 %v805, %v814
      %v819 = vmul.f32 %v806, %v815
      %v820 = vld [vmem:[%s8] sm:$0xff]
      %v821 = vld [vmem:[%s8 + $0x8] sm:$0xff]
      %v822 = vld [vmem:[%s8 + $0x10] sm:$0xff]
      %v823 = vld [vmem:[%s8 + $0x18] sm:$0xff]
      %v824 = vadd.f32 %v816, %v820
      %v825 = vadd.f32 %v817, %v821
      %v826 = vadd.f32 %v818, %v822
      %v827 = vadd.f32 %v819, %v823
      %v828 = vld [vmem:[%s9] sm:$0xf]
      %v829 = vld [vmem:[%s9 + $0x4] sm:$0xf]
      %v830 = vld [vmem:[%s9 + $0x8] sm:$0xf]
      %v831 = vld [vmem:[%s9 + $0xc] sm:$0xf]
      %v832 = vpack.c.bf16 %v825, %v824
      %v833 = vpack.c.bf16 %v827, %v826
      %v834 = vld [vmem:[%s10] sm:$0xff]
      %v835 = vld [vmem:[%s10 + $0x8] sm:$0xff]
      %v836 = vld [vmem:[%s10 + $0x10] sm:$0xff]
      %v837 = vld [vmem:[%s10 + $0x18] sm:$0xff]
      %839 = vset.pattern.permute.xlu0 0
      %840 = vperm.xlu0 %839, %v834
      %v841 = vpop.permute.xlu0 %840
      %844 = vset.pattern.permute.xlu0 0
      %845 = vperm.xlu0 %844, %v835
      %v846 = vpop.permute.xlu0 %845
      %849 = vset.pattern.permute.xlu0 0
      %850 = vperm.xlu0 %849, %v836
      %v851 = vpop.permute.xlu0 %850
      %854 = vset.pattern.permute.xlu0 0
      %855 = vperm.xlu0 %854, %v837
      %v856 = vpop.permute.xlu0 %855
      %v862 = vunpack.c.l.b16 %v828
      %v863 = vunpack.c.l.b16 %v829
      %v864 = vunpack.c.l.b16 %v830
      %v865 = vunpack.c.l.b16 %v831
      %v866 = vpack.c.b16 %v863, %v862
      %v867 = vpack.c.b16 %v865, %v864
      %v869 = vsel %vm519, %v866, 0
      %v872 = vsel %vm519, %v867, 0
      %874 = vmatpush.bf16.msra.mxu0 0
      %875 = vmatpush.bf16.msra.mxu0 0
      %876 = vmatpush.bf16.msra.mxu0 0
      %877 = vmatpush.bf16.msra.mxu0 0
      %878 = vmatpush.bf16.msra.mxu0 0
      %879 = vmatpush.bf16.msra.mxu0 0
      %880 = vmatpush.bf16.msra.mxu0 %v833
      %881 = vmatpush.bf16.msra.mxu0 %v832
      %882 = vmatmul.bf16.gmra.mxu0 %v869
      %v883 = vpop.f32.mrf.mxu0
      %v884 = vadd.f32 %v841, %v883
      %v885 = vpop.f32.mrf.mxu0
      %v886 = vadd.f32 %v846, %v885
      %887 = vmatmul.bf16.gmra.mxu0 %v872
      %v888 = vpop.f32.mrf.mxu0
      %v889 = vadd.f32 %v851, %v888
      %v890 = vpop.f32.mrf.mxu0
      %v891 = vadd.f32 %v856, %v890
      %892 = vdwg.mxu0
      %v893 = vld [vmem:[%s11] sm:$0xf]
      %v894 = vld [vmem:[%s11 + $0x4] sm:$0xf]
      %v895 = vld [vmem:[%s11 + $0x8] sm:$0xf]
      %v896 = vld [vmem:[%s11 + $0xc] sm:$0xf]
      %v897 = vpack.c.bf16 %v886, %v884
      %v898 = vpack.c.bf16 %v891, %v889
      %v899 = vld [vmem:[%s12] sm:$0xff]
      %v900 = vld [vmem:[%s12 + $0x8] sm:$0xff]
      %v901 = vld [vmem:[%s12 + $0x10] sm:$0xff]
      %v902 = vld [vmem:[%s12 + $0x18] sm:$0xff]
      %904 = vset.pattern.permute.xlu0 0
      %905 = vperm.xlu0 %904, %v899
      %v906 = vpop.permute.xlu0 %905
      %909 = vset.pattern.permute.xlu0 0
      %910 = vperm.xlu0 %909, %v900
      %v911 = vpop.permute.xlu0 %910
      %914 = vset.pattern.permute.xlu0 0
      %915 = vperm.xlu0 %914, %v901
      %v916 = vpop.permute.xlu0 %915
      %919 = vset.pattern.permute.xlu0 0
      %920 = vperm.xlu0 %919, %v902
      %v921 = vpop.permute.xlu0 %920
      %v927 = vunpack.c.l.b16 %v893
      %v928 = vunpack.c.l.b16 %v894
      %v929 = vunpack.c.l.b16 %v895
      %v930 = vunpack.c.l.b16 %v896
      %v931 = vpack.c.b16 %v928, %v927
      %v932 = vpack.c.b16 %v930, %v929
      %v934 = vsel %vm519, %v931, 0
      %v937 = vsel %vm519, %v932, 0
      %939 = vmatpush.bf16.msra.mxu0 0
      %940 = vmatpush.bf16.msra.mxu0 0
      %941 = vmatpush.bf16.msra.mxu0 0
      %942 = vmatpush.bf16.msra.mxu0 0
      %943 = vmatpush.bf16.msra.mxu0 0
      %944 = vmatpush.bf16.msra.mxu0 0
      %945 = vmatpush.bf16.msra.mxu0 %v898
      %946 = vmatpush.bf16.msra.mxu0 %v897
      %947 = vmatmul.bf16.gmra.mxu0 %v934
      %v948 = vpop.f32.mrf.mxu0
      %v949 = vadd.f32 %v906, %v948
      %v950 = vpop.f32.mrf.mxu0
      %v951 = vadd.f32 %v911, %v950
      %952 = vmatmul.bf16.gmra.mxu0 %v937
      %v953 = vpop.f32.mrf.mxu0
      %v954 = vadd.f32 %v916, %v953
      %v955 = vpop.f32.mrf.mxu0
      %v956 = vadd.f32 %v921, %v955
      %957 = vdwg.mxu0
      %958 = vst.msk [vmem:[%s457] sm:$0xff] %vm688, %v949
      %959 = vst.msk [vmem:[%s457 + $0x8] sm:$0xff] %vm688, %v951
      %960 = vst.msk [vmem:[%s457 + $0x10] sm:$0xff] %vm688, %v954
      %961 = vst.msk [vmem:[%s457 + $0x18] sm:$0xff] %vm688, %v956
      %p962 = scmp.lt.s32.totalorder %s24, 1
      %s963 = scalar_select %p962, %s24, 1
      %s964 = smul.addr %s963, 4
      %s965 = smul.addr %s964, 8
      %s966 = scalar_lea.vmem %s13, %s965
      // Predicated region
      $region73: #{tpu_custom_call.1} parent=71 // pred_check
        %p967 = pneg %p325
      $region74: #{tpu_custom_call.1} parent=71 // pred_check_branch
        %969 = sbr.rel (%p967) target = $region76
      $region75: #{tpu_custom_call.1} parent=71 // pred_region
        _
      $region76: #{tpu_custom_call.1} parent=71 // pred_fallthru
        _
    $region72: #{tpu_custom_call.1} parent=5 // pred_fallthru
      _
    %p970 = scmp.le.s32.totalorder 2, %s19
    // Predicated region
    $region77: #{tpu_custom_call.1} parent=5 // pred_check
      %p971 = pneg %p970
    $region78: #{tpu_custom_call.1} parent=5 // pred_check_branch
      %973 = sbr.rel (%p971) target = $region80
    $region79: #{tpu_custom_call.1} parent=5 // pred_region
      %s974 = ssub.s32 %s19, 2
      // Predicated region
      $region81: #{tpu_custom_call.1} parent=79 // pred_check
        %p975 = pneg %p331
      $region82: #{tpu_custom_call.1} parent=79 // pred_check_branch
        %977 = sbr.rel (%p975) target = $region84
      $region83: #{tpu_custom_call.1} parent=79 // pred_region
        %p978 = scmp.lt.s32.totalorder %s25, 1
        %s979 = scalar_select %p978, %s25, 1
        %s980 = smul.addr %s979, 4
        %s981 = smul.addr %s980, 8
        %s982 = scalar_lea.vmem %s13, %s981
      $region84: #{tpu_custom_call.1} parent=79 // pred_fallthru
        _
    $region80: #{tpu_custom_call.1} parent=5 // pred_fallthru
      _
  $region6: #{tpu_custom_call.1} parent=0 // loop_footer
    %s23 = sadd.s32 1, %s19
  $region7: #{tpu_custom_call.1} parent=0 // loop_footer_branch
    %18 = sbr.rel target = $region3
  $region8: #{tpu_custom_call.1} parent=0 // loop_exit
    _

</llo_original>
